<compile_context>
chip_gen: v7x
topology: tpu7x:2x2x1
jax: 0.10.0
libtpu: 0.0.40
codegen_flags: <defaults>
</compile_context>

<pallas_src>
import functools

import jax
import jax.numpy as jnp
from jax import lax
from jax.experimental import pallas as pl
from jax.experimental.pallas import tpu as pltpu


def _round_up(x, m):
    return (x + m - 1) // m * m


def _sdne_kernel(x_ref,
                 w1_ref, b1_ref, w2_ref, b2_ref, w3_ref, b3_ref,
                 w4_ref, b4_ref, w5_ref, b5_ref, w6_ref, b6_ref,
                 pos_ref, rec_ref):
    """One row-tile of: encoder -> Disk2 projection -> decoder.

    w3/b3/w4 and w6/b6 arrive pre-padded (zero columns / rows) so that the
    embedding and reconstruction blocks are already lane-dense (width 128);
    the padded columns are mathematically exact zeros.
    """
    x = x_ref[...]

    # ---- encoder (3 x Linear + Tanh) ----
    h = jnp.tanh(jnp.dot(x, w1_ref[...], preferred_element_type=jnp.float32)
                 + b1_ref[...])
    h = jnp.tanh(jnp.dot(h, w2_ref[...], preferred_element_type=jnp.float32)
                 + b2_ref[...])
    emb = jnp.tanh(jnp.dot(h, w3_ref[...], preferred_element_type=jnp.float32)
                   + b3_ref[...])          # padded cols are exactly 0

    # ---- Disk2: project each embedding row into the open unit disk ----
    # TODO(synk): Disk2 source not in the provided module; modeled as
    #             x * tanh(||x||) / ||x|| (direction preserved, radius in (0,1)).
    sq = jnp.sum(emb * emb, axis=-1, keepdims=True)   # zero-padded cols don't contribute
    inv = lax.rsqrt(sq + 1e-12)                       # EUP rsqrt; ~free vs. exact divide
    scale = jnp.tanh(sq * inv) * inv                  # sq*inv == ||emb||, inv == 1/||emb||
    pos = emb * scale
    pos_ref[...] = pos.astype(pos_ref.dtype)          # lane-dense (TN, 128) store

    # ---- decoder (3 x Linear + Tanh) applied to position ----
    d = jnp.tanh(jnp.dot(pos, w4_ref[...], preferred_element_type=jnp.float32)
                 + b4_ref[...])                       # padded rows of w4 are 0
    d = jnp.tanh(jnp.dot(d, w5_ref[...], preferred_element_type=jnp.float32)
                 + b5_ref[...])
    rec = jnp.tanh(jnp.dot(d, w6_ref[...], preferred_element_type=jnp.float32)
                   + b6_ref[...])
    rec_ref[...] = rec.astype(rec_ref.dtype)          # lane-dense (TN, 128) store


@functools.partial(jax.jit, static_argnames=("row_tile",))
def sdne_forward(x, params, *, row_tile=2048):
    """x: [N, dim_input]. params: dict of weights/biases. Returns (position, output2)."""
    n, dim_in = x.shape
    dim_emb = params["w3"].shape[1]

    # ---- row tiling: TN multiple of 8; whole (padded) batch if it is small ----
    n_pad8 = _round_up(max(n, 1), 8)
    tn = min(_round_up(row_tile, 8), n_pad8)
    n_pad = _round_up(n_pad8, tn)
    x_p = jnp.pad(x, ((0, n_pad - n), (0, 0))) if n_pad != n else x

    # ---- lane-dense padding of the output-producing weights (zero columns/rows;
    #      padded output columns are exact zeros and get sliced off) ----
    emb_pad = _round_up(dim_emb, 128)
    in_pad = _round_up(dim_in, 128)
    w3p = jnp.pad(params["w3"], ((0, 0), (0, emb_pad - dim_emb)))
    b3p = jnp.pad(params["b3"], ((0, 0), (0, emb_pad - dim_emb)))
    w4p = jnp.pad(params["w4"], ((0, emb_pad - dim_emb), (0, 0)))
    w6p = jnp.pad(params["w6"], ((0, 0), (0, in_pad - dim_in)))
    b6p = jnp.pad(params["b6"], ((0, 0), (0, in_pad - dim_in)))

    weight_args = (params["w1"], params["b1"], params["w2"], params["b2"],
                   w3p, b3p, w4p, params["b4"], params["w5"], params["b5"],
                   w6p, b6p)

    # Weights / biases: constant index_map -> DMA'd once, VMEM-resident.
    def resident(a):
        return pl.BlockSpec(a.shape, lambda i: (0, 0))

    grid = (n_pad // tn,)

    pos_pad, rec_pad = pl.pallas_call(
        _sdne_kernel,
        out_shape=(jax.ShapeDtypeStruct((n_pad, emb_pad), jnp.float32),
                   jax.ShapeDtypeStruct((n_pad, in_pad), jnp.float32)),
        grid=grid,
        in_specs=[pl.BlockSpec((tn, dim_in), lambda i: (i, 0))]
                 + [resident(a) for a in weight_args],
        out_specs=(pl.BlockSpec((tn, emb_pad), lambda i: (i, 0)),
                   pl.BlockSpec((tn, in_pad), lambda i: (i, 0))),
        compiler_params=pltpu.CompilerParams(
            dimension_semantics=("parallel",),      # megacore split on v7x
            vmem_limit_bytes=32 << 20,              # safe on v5e/v6e (128 MiB) and v7x (64 MiB)
        ),
    )(x_p, *weight_args)

    position = pos_pad[:n, :dim_emb]
    output2 = rec_pad[:n, :dim_in]
    return position, output2


def init_params(key, dim_input, dim_intermediate, dim_embedding):
    """Deterministic PyTorch-Linear-style init: U(-1/sqrt(fan_in), 1/sqrt(fan_in)).

    Weights stored as [in_features, out_features] (y = x @ W + b)."""
    dims = [
        ("w1", "b1", dim_input, dim_intermediate),
        ("w2", "b2", dim_intermediate, dim_intermediate),
        ("w3", "b3", dim_intermediate, dim_embedding),
        ("w4", "b4", dim_embedding, dim_intermediate),
        ("w5", "b5", dim_intermediate, dim_intermediate),
        ("w6", "b6", dim_intermediate, dim_input),
    ]
    params = {}
    for (wname, bname, fan_in, fan_out) in dims:
        key, kw, kb = jax.random.split(key, 3)
        bound = 1.0 / jnp.sqrt(fan_in)
        params[wname] = jax.random.uniform(
            kw, (fan_in, fan_out), jnp.float32, -bound, bound)
        params[bname] = jax.random.uniform(
            kb, (1, fan_out), jnp.float32, -bound, bound)
    return params


def sdne_reference(x, params):
    """Plain-JAX reference for correctness checking."""
    h = jnp.tanh(x @ params["w1"] + params["b1"])
    h = jnp.tanh(h @ params["w2"] + params["b2"])
    emb = jnp.tanh(h @ params["w3"] + params["b3"])
    norm = jnp.sqrt(jnp.sum(emb * emb, axis=-1, keepdims=True) + 1e-12)
    pos = emb * (jnp.tanh(norm) / norm)
    d = jnp.tanh(pos @ params["w4"] + params["b4"])
    d = jnp.tanh(d @ params["w5"] + params["b5"])
    out2 = jnp.tanh(d @ params["w6"] + params["b6"])
    return pos, out2


if __name__ == "__main__":
    # Small shapes consistent with the module: batch=8, dim_input=16,
    # dim_intermediate=32, dim_embedding=8.
    N, DIM_IN, DIM_MID, DIM_EMB = 8, 16, 32, 8

    key = jax.random.PRNGKey(0)
    key, kx = jax.random.split(key)
    x = jax.random.normal(kx, (N, DIM_IN), jnp.float32)
    params = init_params(key, DIM_IN, DIM_MID, DIM_EMB)

    pos, out2 = sdne_forward(x, params)
    jax.block_until_ready((pos, out2))

    ref_pos, ref_out2 = sdne_reference(x, params)
    assert pos.shape == (N, DIM_EMB) and out2.shape == (N, DIM_IN)
    assert jnp.allclose(pos, ref_pos, atol=5e-5, rtol=5e-5)
    assert jnp.allclose(out2, ref_out2, atol=5e-5, rtol=5e-5)

    # Exercise the multi-step grid + row-padding path (batch not a multiple of
    # the row tile) with a deliberately small tile.
    key, kx2 = jax.random.split(key)
    x2 = jax.random.normal(kx2, (40, DIM_IN), jnp.float32)
    pos2, out2_2 = sdne_forward(x2, params, row_tile=16)
    jax.block_until_ready((pos2, out2_2))
    ref_pos2, ref_out2_2 = sdne_reference(x2, params)
    assert pos2.shape == (40, DIM_EMB) and out2_2.shape == (40, DIM_IN)
    assert jnp.allclose(pos2, ref_pos2, atol=5e-5, rtol=5e-5)
    assert jnp.allclose(out2_2, ref_out2_2, atol=5e-5, rtol=5e-5)

    print("KERNEL_OK")
</pallas_src>

<mosaic_0001>
module attributes {stable_mosaic.version = 11 : i64} {
  func.func @_sdne_kernel(%arg0: i32, %arg1: memref<8x16xf32, #tpu.memory_space<vmem>>, %arg2: memref<16x32xf32, #tpu.memory_space<vmem>>, %arg3: memref<1x32xf32, #tpu.memory_space<vmem>>, %arg4: memref<32x32xf32, #tpu.memory_space<vmem>>, %arg5: memref<1x32xf32, #tpu.memory_space<vmem>>, %arg6: memref<32x128xf32, #tpu.memory_space<vmem>>, %arg7: memref<1x128xf32, #tpu.memory_space<vmem>>, %arg8: memref<128x32xf32, #tpu.memory_space<vmem>>, %arg9: memref<1x32xf32, #tpu.memory_space<vmem>>, %arg10: memref<32x32xf32, #tpu.memory_space<vmem>>, %arg11: memref<1x32xf32, #tpu.memory_space<vmem>>, %arg12: memref<32x128xf32, #tpu.memory_space<vmem>>, %arg13: memref<1x128xf32, #tpu.memory_space<vmem>>, %arg14: memref<8x128xf32, #tpu.memory_space<vmem>>, %arg15: memref<8x128xf32, #tpu.memory_space<vmem>>) attributes {dimension_semantics = [#tpu.dimension_semantics<parallel>], iteration_bounds = array<i64: 1>, scalar_prefetch = 0 : i64, scratch_operands = 0 : i64, tpu.core_type = #tpu.core_type<tc>, window_params = [{transform_indices = @transform_0, window_bounds = array<i64: 8, 16>}, {pipeline_mode = #tpu.pipeline_mode<synchronous>, transform_indices = @transform_1, window_bounds = array<i64: 16, 32>}, {pipeline_mode = #tpu.pipeline_mode<synchronous>, transform_indices = @transform_2, window_bounds = array<i64: 1, 32>}, {pipeline_mode = #tpu.pipeline_mode<synchronous>, transform_indices = @transform_3, window_bounds = array<i64: 32, 32>}, {pipeline_mode = #tpu.pipeline_mode<synchronous>, transform_indices = @transform_4, window_bounds = array<i64: 1, 32>}, {pipeline_mode = #tpu.pipeline_mode<synchronous>, transform_indices = @transform_5, window_bounds = array<i64: 32, 128>}, {pipeline_mode = #tpu.pipeline_mode<synchronous>, transform_indices = @transform_6, window_bounds = array<i64: 1, 128>}, {pipeline_mode = #tpu.pipeline_mode<synchronous>, transform_indices = @transform_7, window_bounds = array<i64: 128, 32>}, {pipeline_mode = #tpu.pipeline_mode<synchronous>, transform_indices = @transform_8, window_bounds = array<i64: 1, 32>}, {pipeline_mode = #tpu.pipeline_mode<synchronous>, transform_indices = @transform_9, window_bounds = array<i64: 32, 32>}, {pipeline_mode = #tpu.pipeline_mode<synchronous>, transform_indices = @transform_10, window_bounds = array<i64: 1, 32>}, {pipeline_mode = #tpu.pipeline_mode<synchronous>, transform_indices = @transform_11, window_bounds = array<i64: 32, 128>}, {pipeline_mode = #tpu.pipeline_mode<synchronous>, transform_indices = @transform_12, window_bounds = array<i64: 1, 128>}, {transform_indices = @transform_13, window_bounds = array<i64: 8, 128>}, {transform_indices = @transform_14, window_bounds = array<i64: 8, 128>}]} {
    %c0 = arith.constant 0 : index
    %c0_0 = arith.constant 0 : index
    %0 = vector.load %arg1[%c0, %c0_0] : memref<8x16xf32, #tpu.memory_space<vmem>>, vector<8x16xf32>
    %c0_1 = arith.constant 0 : index
    %c0_2 = arith.constant 0 : index
    %1 = vector.load %arg2[%c0_1, %c0_2] : memref<16x32xf32, #tpu.memory_space<vmem>>, vector<16x32xf32>
    %cst = arith.constant dense<0.000000e+00> : vector<8x32xf32>
    %2 = tpu.matmul %0, %1, %cst {dimension_numbers = #tpu.dot_dimension_numbers<[1], [0], [0], [1], [0, 0, 1, 1], [], []>} : vector<8x16xf32>, vector<16x32xf32>, vector<8x32xf32> -> vector<8x32xf32>
    %c0_3 = arith.constant 0 : index
    %c0_4 = arith.constant 0 : index
    %3 = vector.load %arg3[%c0_3, %c0_4] : memref<1x32xf32, #tpu.memory_space<vmem>>, vector<1x32xf32>
    %4 = vector.broadcast %3 : vector<1x32xf32> to vector<8x32xf32>
    %5 = arith.addf %2, %4 : vector<8x32xf32>
    %6 = math.tanh %5 : vector<8x32xf32>
    %c0_5 = arith.constant 0 : index
    %c0_6 = arith.constant 0 : index
    %7 = vector.load %arg4[%c0_5, %c0_6] : memref<32x32xf32, #tpu.memory_space<vmem>>, vector<32x32xf32>
    %cst_7 = arith.constant dense<0.000000e+00> : vector<8x32xf32>
    %8 = tpu.matmul %6, %7, %cst_7 {dimension_numbers = #tpu.dot_dimension_numbers<[1], [0], [0], [1], [0, 0, 1, 1], [], []>} : vector<8x32xf32>, vector<32x32xf32>, vector<8x32xf32> -> vector<8x32xf32>
    %c0_8 = arith.constant 0 : index
    %c0_9 = arith.constant 0 : index
    %9 = vector.load %arg5[%c0_8, %c0_9] : memref<1x32xf32, #tpu.memory_space<vmem>>, vector<1x32xf32>
    %10 = vector.broadcast %9 : vector<1x32xf32> to vector<8x32xf32>
    %11 = arith.addf %8, %10 : vector<8x32xf32>
    %12 = math.tanh %11 : vector<8x32xf32>
    %c0_10 = arith.constant 0 : index
    %c0_11 = arith.constant 0 : index
    %13 = vector.load %arg6[%c0_10, %c0_11] : memref<32x128xf32, #tpu.memory_space<vmem>>, vector<32x128xf32>
    %cst_12 = arith.constant dense<0.000000e+00> : vector<8x128xf32>
    %14 = tpu.matmul %12, %13, %cst_12 {dimension_numbers = #tpu.dot_dimension_numbers<[1], [0], [0], [1], [0, 0, 1, 1], [], []>} : vector<8x32xf32>, vector<32x128xf32>, vector<8x128xf32> -> vector<8x128xf32>
    %c0_13 = arith.constant 0 : index
    %c0_14 = arith.constant 0 : index
    %15 = vector.load %arg7[%c0_13, %c0_14] : memref<1x128xf32, #tpu.memory_space<vmem>>, vector<1x128xf32>
    %16 = vector.broadcast %15 : vector<1x128xf32> to vector<8x128xf32>
    %17 = arith.addf %14, %16 : vector<8x128xf32>
    %18 = math.tanh %17 : vector<8x128xf32>
    %19 = arith.mulf %18, %18 : vector<8x128xf32>
    %cst_15 = arith.constant dense<0.000000e+00> : vector<8xf32>
    %20 = vector.multi_reduction <add>, %19, %cst_15 [1] : vector<8x128xf32> to vector<8xf32>
    %21 = vector.shape_cast %20 : vector<8xf32> to vector<8x1xf32>
    %cst_16 = arith.constant 9.99999996E-13 : f32
    %22 = vector.broadcast %cst_16 : f32 to vector<8x1xf32>
    %23 = arith.addf %21, %22 : vector<8x1xf32>
    %24 = math.rsqrt %23 : vector<8x1xf32>
    %25 = arith.mulf %21, %24 : vector<8x1xf32>
    %26 = math.tanh %25 : vector<8x1xf32>
    %27 = arith.mulf %26, %24 : vector<8x1xf32>
    %28 = vector.broadcast %27 : vector<8x1xf32> to vector<8x128xf32>
    %29 = arith.mulf %18, %28 : vector<8x128xf32>
    %c0_17 = arith.constant 0 : index
    %c0_18 = arith.constant 0 : index
    %30 = vector.load %arg14[%c0_17, %c0_18] : memref<8x128xf32, #tpu.memory_space<vmem>>, vector<8x128xf32>
    tpu.vector_store %arg14[%c0_17, %c0_18], %29 {strides = array<i32>} : memref<8x128xf32, #tpu.memory_space<vmem>>, vector<8x128xf32>,
    %c0_19 = arith.constant 0 : index
    %c0_20 = arith.constant 0 : index
    %31 = vector.load %arg8[%c0_19, %c0_20] : memref<128x32xf32, #tpu.memory_space<vmem>>, vector<128x32xf32>
    %cst_21 = arith.constant dense<0.000000e+00> : vector<8x32xf32>
    %32 = tpu.matmul %29, %31, %cst_21 {dimension_numbers = #tpu.dot_dimension_numbers<[1], [0], [0], [1], [0, 0, 1, 1], [], []>} : vector<8x128xf32>, vector<128x32xf32>, vector<8x32xf32> -> vector<8x32xf32>
    %c0_22 = arith.constant 0 : index
    %c0_23 = arith.constant 0 : index
    %33 = vector.load %arg9[%c0_22, %c0_23] : memref<1x32xf32, #tpu.memory_space<vmem>>, vector<1x32xf32>
    %34 = vector.broadcast %33 : vector<1x32xf32> to vector<8x32xf32>
    %35 = arith.addf %32, %34 : vector<8x32xf32>
    %36 = math.tanh %35 : vector<8x32xf32>
    %c0_24 = arith.constant 0 : index
    %c0_25 = arith.constant 0 : index
    %37 = vector.load %arg10[%c0_24, %c0_25] : memref<32x32xf32, #tpu.memory_space<vmem>>, vector<32x32xf32>
    %cst_26 = arith.constant dense<0.000000e+00> : vector<8x32xf32>
    %38 = tpu.matmul %36, %37, %cst_26 {dimension_numbers = #tpu.dot_dimension_numbers<[1], [0], [0], [1], [0, 0, 1, 1], [], []>} : vector<8x32xf32>, vector<32x32xf32>, vector<8x32xf32> -> vector<8x32xf32>
    %c0_27 = arith.constant 0 : index
    %c0_28 = arith.constant 0 : index
    %39 = vector.load %arg11[%c0_27, %c0_28] : memref<1x32xf32, #tpu.memory_space<vmem>>, vector<1x32xf32>
    %40 = vector.broadcast %39 : vector<1x32xf32> to vector<8x32xf32>
    %41 = arith.addf %38, %40 : vector<8x32xf32>
    %42 = math.tanh %41 : vector<8x32xf32>
    %c0_29 = arith.constant 0 : index
    %c0_30 = arith.constant 0 : index
    %43 = vector.load %arg12[%c0_29, %c0_30] : memref<32x128xf32, #tpu.memory_space<vmem>>, vector<32x128xf32>
    %cst_31 = arith.constant dense<0.000000e+00> : vector<8x128xf32>
    %44 = tpu.matmul %42, %43, %cst_31 {dimension_numbers = #tpu.dot_dimension_numbers<[1], [0], [0], [1], [0, 0, 1, 1], [], []>} : vector<8x32xf32>, vector<32x128xf32>, vector<8x128xf32> -> vector<8x128xf32>
    %c0_32 = arith.constant 0 : index
    %c0_33 = arith.constant 0 : index
    %45 = vector.load %arg13[%c0_32, %c0_33] : memref<1x128xf32, #tpu.memory_space<vmem>>, vector<1x128xf32>
    %46 = vector.broadcast %45 : vector<1x128xf32> to vector<8x128xf32>
    %47 = arith.addf %44, %46 : vector<8x128xf32>
    %48 = math.tanh %47 : vector<8x128xf32>
    %c0_34 = arith.constant 0 : index
    %c0_35 = arith.constant 0 : index
    %49 = vector.load %arg15[%c0_34, %c0_35] : memref<8x128xf32, #tpu.memory_space<vmem>>, vector<8x128xf32>
    tpu.vector_store %arg15[%c0_34, %c0_35], %48 {strides = array<i32>} : memref<8x128xf32, #tpu.memory_space<vmem>>, vector<8x128xf32>,
    return
  }
  func.func @transform_0(%arg0: i32) -> (i32, i32) {
    %c0_i32 = arith.constant 0 : i32
    %c0_i32_0 = arith.constant 0 : i32
    return %arg0, %c0_i32 : i32, i32
  }
  func.func @transform_1(%arg0: i32) -> (i32, i32) {
    %c0_i32 = arith.constant 0 : i32
    %c0_i32_0 = arith.constant 0 : i32
    %c0_i32_1 = arith.constant 0 : i32
    return %c0_i32, %c0_i32_0 : i32, i32
  }
  func.func @transform_2(%arg0: i32) -> (i32, i32) {
    %c0_i32 = arith.constant 0 : i32
    %c0_i32_0 = arith.constant 0 : i32
    %c0_i32_1 = arith.constant 0 : i32
    return %c0_i32, %c0_i32_0 : i32, i32
  }
  func.func @transform_3(%arg0: i32) -> (i32, i32) {
    %c0_i32 = arith.constant 0 : i32
    %c0_i32_0 = arith.constant 0 : i32
    %c0_i32_1 = arith.constant 0 : i32
    return %c0_i32, %c0_i32_0 : i32, i32
  }
  func.func @transform_4(%arg0: i32) -> (i32, i32) {
    %c0_i32 = arith.constant 0 : i32
    %c0_i32_0 = arith.constant 0 : i32
    %c0_i32_1 = arith.constant 0 : i32
    return %c0_i32, %c0_i32_0 : i32, i32
  }
  func.func @transform_5(%arg0: i32) -> (i32, i32) {
    %c0_i32 = arith.constant 0 : i32
    %c0_i32_0 = arith.constant 0 : i32
    %c0_i32_1 = arith.constant 0 : i32
    return %c0_i32, %c0_i32_0 : i32, i32
  }
  func.func @transform_6(%arg0: i32) -> (i32, i32) {
    %c0_i32 = arith.constant 0 : i32
    %c0_i32_0 = arith.constant 0 : i32
    %c0_i32_1 = arith.constant 0 : i32
    return %c0_i32, %c0_i32_0 : i32, i32
  }
  func.func @transform_7(%arg0: i32) -> (i32, i32) {
    %c0_i32 = arith.constant 0 : i32
    %c0_i32_0 = arith.constant 0 : i32
    %c0_i32_1 = arith.constant 0 : i32
    return %c0_i32, %c0_i32_0 : i32, i32
  }
  func.func @transform_8(%arg0: i32) -> (i32, i32) {
    %c0_i32 = arith.constant 0 : i32
    %c0_i32_0 = arith.constant 0 : i32
    %c0_i32_1 = arith.constant 0 : i32
    return %c0_i32, %c0_i32_0 : i32, i32
  }
  func.func @transform_9(%arg0: i32) -> (i32, i32) {
    %c0_i32 = arith.constant 0 : i32
    %c0_i32_0 = arith.constant 0 : i32
    %c0_i32_1 = arith.constant 0 : i32
    return %c0_i32, %c0_i32_0 : i32, i32
  }
  func.func @transform_10(%arg0: i32) -> (i32, i32) {
    %c0_i32 = arith.constant 0 : i32
    %c0_i32_0 = arith.constant 0 : i32
    %c0_i32_1 = arith.constant 0 : i32
    return %c0_i32, %c0_i32_0 : i32, i32
  }
  func.func @transform_11(%arg0: i32) -> (i32, i32) {
    %c0_i32 = arith.constant 0 : i32
    %c0_i32_0 = arith.constant 0 : i32
    %c0_i32_1 = arith.constant 0 : i32
    return %c0_i32, %c0_i32_0 : i32, i32
  }
  func.func @transform_12(%arg0: i32) -> (i32, i32) {
    %c0_i32 = arith.constant 0 : i32
    %c0_i32_0 = arith.constant 0 : i32
    %c0_i32_1 = arith.constant 0 : i32
    return %c0_i32, %c0_i32_0 : i32, i32
  }
  func.func @transform_13(%arg0: i32) -> (i32, i32) {
    %c0_i32 = arith.constant 0 : i32
    %c0_i32_0 = arith.constant 0 : i32
    return %arg0, %c0_i32 : i32, i32
  }
  func.func @transform_14(%arg0: i32) -> (i32, i32) {
    %c0_i32 = arith.constant 0 : i32
    %c0_i32_0 = arith.constant 0 : i32
    return %arg0, %c0_i32 : i32, i32
  }
}

</mosaic_0001>

<llo_original>
// kernel: sdne_forward.1
$region0: #{sdne_forward.1}
  #allocation0 [shape = 'u32[]', space=smem, size = 0x4, offset = 0x4, fixed_abs, tag = 'smem constant byte address 0x4 - core index']
  #allocation1 [shape = 'u32[144,128]{1,0:T(1,128)}', space=vmem, size = 0x12000, scoped, tag = 'internal scratch']
  %s0 = inlined_call_operand.vmem [shape: f32[8,16], index: 0, kind: input, shape index: {}]
  %s1 = inlined_call_operand.vmem [shape: f32[16,32], index: 1, kind: input, shape index: {}]
  %s2 = inlined_call_operand.vmem [shape: f32[1,32], index: 2, kind: input, shape index: {}]
  %s3 = inlined_call_operand.vmem [shape: f32[32,32], index: 3, kind: input, shape index: {}]
  %s4 = inlined_call_operand.vmem [shape: f32[1,32], index: 4, kind: input, shape index: {}]
  %s5 = inlined_call_operand.vmem [shape: f32[32,128], index: 5, kind: input, shape index: {}]
  %s6 = inlined_call_operand.vmem [shape: f32[1,128], index: 6, kind: input, shape index: {}]
  %s7 = inlined_call_operand.vmem [shape: f32[128,32], index: 7, kind: input, shape index: {}]
  %s8 = inlined_call_operand.vmem [shape: f32[1,32], index: 8, kind: input, shape index: {}]
  %s9 = inlined_call_operand.vmem [shape: f32[32,32], index: 9, kind: input, shape index: {}]
  %s10 = inlined_call_operand.vmem [shape: f32[1,32], index: 10, kind: input, shape index: {}]
  %s11 = inlined_call_operand.vmem [shape: f32[32,128], index: 11, kind: input, shape index: {}]
  %s12 = inlined_call_operand.vmem [shape: f32[1,128], index: 12, kind: input, shape index: {}]
  %s13 = inlined_call_operand.hbm [shape: f32[8,128], index: 13, kind: output, shape index: {0}]
  %s14 = inlined_call_operand.hbm [shape: f32[8,128], index: 14, kind: output, shape index: {1}]
  %15 = xla_tuple %s13, %s14
  %s16 = sld [smem:[#allocation0]]
  $region70: #{sdne_forward.1} parent=0
    _
  %s18 = ssub.s32 1, %s16
  %s19 = scalar_select 0, %s18, %s16
  $region1: #{sdne_forward.1} parent=0
    #allocation2 [shape = 'u8[4096]{0}', space=vmem, size = 0x1000, scoped, tag = 'output window, operand 0, single buffered']
    #allocation3 [shape = 's32[1]{0}', space=sflag, size = 0x4, scoped, tag = 'scoped memory for sdne_forward.1']
    #allocation4 [shape = 'u8[4096]{0}', space=vmem, size = 0x1000, scoped, tag = 'output window, operand 1, single buffered']
    #allocation5 [shape = 's32[1]{0}', space=sflag, size = 0x4, scoped, tag = 'scoped memory for sdne_forward.1']
    %20 = vsyncpa [#allocation3], 0
    %21 = vsyncpa [#allocation5], 0
    // Predicated region
    $region2: #{sdne_forward.1} parent=1 // pred_check
      _
    $region3: #{sdne_forward.1} parent=1 // pred_check_branch
      %23 = sbr.rel (0) target = $region5
    $region4: #{sdne_forward.1} parent=1 // pred_region
      _
    $region5: #{sdne_forward.1} parent=1 // pred_fallthru
      _
    // Predicated region
    $region6: #{sdne_forward.1} parent=1 // pred_check
      _
    $region7: #{sdne_forward.1} parent=1 // pred_check_branch
      %25 = sbr.rel (0) target = $region9
    $region8: #{sdne_forward.1} parent=1 // pred_region
      _
    $region9: #{sdne_forward.1} parent=1 // pred_fallthru
      _
    // Predicated region
    $region10: #{sdne_forward.1} parent=1 // pred_check
      _
    $region11: #{sdne_forward.1} parent=1 // pred_check_branch
      %27 = sbr.rel (0) target = $region13
    $region12: #{sdne_forward.1} parent=1 // pred_region
      _
    $region13: #{sdne_forward.1} parent=1 // pred_fallthru
      _
    // Predicated region
    $region14: #{sdne_forward.1} parent=1 // pred_check
      _
    $region15: #{sdne_forward.1} parent=1 // pred_check_branch
      %29 = sbr.rel (0) target = $region17
    $region16: #{sdne_forward.1} parent=1 // pred_region
      _
    $region17: #{sdne_forward.1} parent=1 // pred_fallthru
      _
    // Predicated region
    $region18: #{sdne_forward.1} parent=1 // pred_check
      _
    $region19: #{sdne_forward.1} parent=1 // pred_check_branch
      %31 = sbr.rel (0) target = $region21
    $region20: #{sdne_forward.1} parent=1 // pred_region
      _
    $region21: #{sdne_forward.1} parent=1 // pred_fallthru
      _
    // Predicated region
    $region22: #{sdne_forward.1} parent=1 // pred_check
      _
    $region23: #{sdne_forward.1} parent=1 // pred_check_branch
      %33 = sbr.rel (0) target = $region25
    $region24: #{sdne_forward.1} parent=1 // pred_region
      _
    $region25: #{sdne_forward.1} parent=1 // pred_fallthru
      _
    // Predicated region
    $region26: #{sdne_forward.1} parent=1 // pred_check
      _
    $region27: #{sdne_forward.1} parent=1 // pred_check_branch
      %35 = sbr.rel (0) target = $region29
    $region28: #{sdne_forward.1} parent=1 // pred_region
      _
    $region29: #{sdne_forward.1} parent=1 // pred_fallthru
      _
    // Predicated region
    $region30: #{sdne_forward.1} parent=1 // pred_check
      _
    $region31: #{sdne_forward.1} parent=1 // pred_check_branch
      %37 = sbr.rel (0) target = $region33
    $region32: #{sdne_forward.1} parent=1 // pred_region
      _
    $region33: #{sdne_forward.1} parent=1 // pred_fallthru
      _
    // Predicated region
    $region34: #{sdne_forward.1} parent=1 // pred_check
      _
    $region35: #{sdne_forward.1} parent=1 // pred_check_branch
      %39 = sbr.rel (0) target = $region37
    $region36: #{sdne_forward.1} parent=1 // pred_region
      _
    $region37: #{sdne_forward.1} parent=1 // pred_fallthru
      _
    // Predicated region
    $region38: #{sdne_forward.1} parent=1 // pred_check
      _
    $region39: #{sdne_forward.1} parent=1 // pred_check_branch
      %41 = sbr.rel (0) target = $region41
    $region40: #{sdne_forward.1} parent=1 // pred_region
      _
    $region41: #{sdne_forward.1} parent=1 // pred_fallthru
      _
    // Predicated region
    $region42: #{sdne_forward.1} parent=1 // pred_check
      _
    $region43: #{sdne_forward.1} parent=1 // pred_check_branch
      %43 = sbr.rel (0) target = $region45
    $region44: #{sdne_forward.1} parent=1 // pred_region
      _
    $region45: #{sdne_forward.1} parent=1 // pred_fallthru
      _
    // Predicated region
    $region46: #{sdne_forward.1} parent=1 // pred_check
      _
    $region47: #{sdne_forward.1} parent=1 // pred_check_branch
      %45 = sbr.rel (0) target = $region49
    $region48: #{sdne_forward.1} parent=1 // pred_region
      _
    $region49: #{sdne_forward.1} parent=1 // pred_fallthru
      _
    // Predicated region
    $region50: #{sdne_forward.1} parent=1 // pred_check
      _
    $region51: #{sdne_forward.1} parent=1 // pred_check_branch
      %47 = sbr.rel (0) target = $region53
    $region52: #{sdne_forward.1} parent=1 // pred_region
      _
    $region53: #{sdne_forward.1} parent=1 // pred_fallthru
      _
    %v48 = vld [vmem:[%s0] sm:$0xff]
    %v49 = vld [vmem:[%s1] sm:$0xff]
    %v50 = vld [vmem:[%s1 + $0x8] sm:$0xff]
    %v51 = vld [vmem:[%s2] sm:$0x1]
    %v53 = vlaneseq
    %v54 = vshrl.u32 %v53, 7
    %v55 = vsub.s32 0, %v54
    %v56 = vrot.slane %v51, %v55
    %vm58 = vcmask 130048
    %v60 = vsel %vm58, %v48, 0
    %62 = vmatprep.subr.mxu0 0.0
    %63 = vmatpush1.msra.mxu0 %v49
    %64 = vmatprep.subr.mxu0 0.0
    %65 = vmatpush1.msra.mxu0 %v50
    %66 = vmatprep.subr.mxu0 0.0
    %67 = vmatpush1.msra.mxu0 0.0
    %68 = vmatprep.subr.mxu0 0.0
    %69 = vmatpush1.msra.mxu0 0.0
    %70 = vmatprep.subr.mxu0 0.0
    %71 = vmatpush1.msra.mxu0 0.0
    %72 = vmatprep.subr.mxu0 0.0
    %73 = vmatpush1.msra.mxu0 0.0
    %74 = vmatprep.subr.mxu0 0.0
    %75 = vmatpush1.msra.mxu0 0.0
    %76 = vmatprep.subr.mxu0 0.0
    %77 = vmatpush1.msra.mxu0 0.0
    %78 = vmatprep.subr.mxu0 0.0
    %79 = vmatpush1.msra.mxu0 0.0
    %80 = vmatprep.subr.mxu0 0.0
    %81 = vmatpush1.msra.mxu0 0.0
    %82 = vmatprep.subr.mxu0 0.0
    %83 = vmatpush1.msra.mxu0 0.0
    %84 = vmatprep.subr.mxu0 0.0
    %85 = vmatpush1.msra.mxu0 0.0
    %86 = vmatprep.subr.mxu0 0.0
    %87 = vmatpush1.msra.mxu0 0.0
    %88 = vmatprep.subr.mxu0 0.0
    %89 = vmatpush1.msra.mxu0 0.0
    %90 = vmatprep.subr.mxu0 0.0
    %91 = vmatpush1.msra.mxu0 0.0
    %92 = vmatprep.subr.mxu0 0.0
    %93 = vmatpush1.msra.mxu0 0.0
    %94 = vmatprep.subr.mxu0 0.0
    %95 = vmatpush1.msra.mxu0 0.0
    %96 = vmatprep.subr.mxu0 0.0
    %97 = vmatpush1.msra.mxu0 0.0
    %98 = vmatprep.subr.mxu0 0.0
    %99 = vmatpush1.msra.mxu0 0.0
    %100 = vmatprep.subr.mxu0 0.0
    %101 = vmatpush1.msra.mxu0 0.0
    %102 = vmatprep.subr.mxu0 0.0
    %103 = vmatpush1.msra.mxu0 0.0
    %104 = vmatprep.subr.mxu0 0.0
    %105 = vmatpush1.msra.mxu0 0.0
    %106 = vmatprep.subr.mxu0 0.0
    %107 = vmatpush1.msra.mxu0 0.0
    %108 = vmatprep.subr.mxu0 0.0
    %109 = vmatpush1.msra.mxu0 0.0
    %110 = vmatprep.subr.mxu0 0.0
    %111 = vmatpush1.msra.mxu0 0.0
    %112 = vmatprep.subr.mxu0 0.0
    %113 = vmatpush1.msra.mxu0 0.0
    %114 = vmatprep.subr.mxu0 0.0
    %115 = vmatpush1.msra.mxu0 0.0
    %116 = vmatprep.subr.mxu0 0.0
    %117 = vmatpush1.msra.mxu0 0.0
    %118 = vmatprep.subr.mxu0 0.0
    %119 = vmatpush1.msra.mxu0 0.0
    %120 = vmatprep.subr.mxu0 0.0
    %121 = vmatpush1.msra.mxu0 0.0
    %122 = vmatprep.subr.mxu0 0.0
    %123 = vmatpush1.msra.mxu0 0.0
    %124 = vmatprep.subr.mxu0 0.0
    %125 = vmatpush1.msra.mxu0 0.0
    %126 = vmatprep.mubr.f32.mxu0 0.0
    %127 = vmatmul.mubr.f32.gmra.mrb[0].mxu0 %v60
    %v128 = vpop.f32.mrb[0].mxu0
    %v129 = vadd.f32 %v56, %v128
    %v130 = vpop.f32.mrb[0].mxu0
    %131 = vdwg.mxu0
    %v132 = vtanh.pop %v129
    %v133 = vld [vmem:[%s3] sm:$0xff]
    %v134 = vld [vmem:[%s3 + $0x8] sm:$0xff]
    %v135 = vld [vmem:[%s3 + $0x10] sm:$0xff]
    %v136 = vld [vmem:[%s3 + $0x18] sm:$0xff]
    %v137 = vld [vmem:[%s4] sm:$0x1]
    %v139 = vlaneseq
    %v140 = vshrl.u32 %v139, 7
    %v141 = vsub.s32 0, %v140
    %v142 = vrot.slane %v137, %v141
    %vm144 = vcmask 261120
    %v146 = vsel %vm144, %v132, 0
    %148 = vmatprep.subr.mxu0 0.0
    %149 = vmatpush1.msra.mxu0 %v133
    %150 = vmatprep.subr.mxu0 0.0
    %151 = vmatpush1.msra.mxu0 %v134
    %152 = vmatprep.subr.mxu0 0.0
    %153 = vmatpush1.msra.mxu0 %v135
    %154 = vmatprep.subr.mxu0 0.0
    %155 = vmatpush1.msra.mxu0 %v136
    %156 = vmatprep.subr.mxu0 0.0
    %157 = vmatpush1.msra.mxu0 0.0
    %158 = vmatprep.subr.mxu0 0.0
    %159 = vmatpush1.msra.mxu0 0.0
    %160 = vmatprep.subr.mxu0 0.0
    %161 = vmatpush1.msra.mxu0 0.0
    %162 = vmatprep.subr.mxu0 0.0
    %163 = vmatpush1.msra.mxu0 0.0
    %164 = vmatprep.subr.mxu0 0.0
    %165 = vmatpush1.msra.mxu0 0.0
    %166 = vmatprep.subr.mxu0 0.0
    %167 = vmatpush1.msra.mxu0 0.0
    %168 = vmatprep.subr.mxu0 0.0
    %169 = vmatpush1.msra.mxu0 0.0
    %170 = vmatprep.subr.mxu0 0.0
    %171 = vmatpush1.msra.mxu0 0.0
    %172 = vmatprep.subr.mxu0 0.0
    %173 = vmatpush1.msra.mxu0 0.0
    %174 = vmatprep.subr.mxu0 0.0
    %175 = vmatpush1.msra.mxu0 0.0
    %176 = vmatprep.subr.mxu0 0.0
    %177 = vmatpush1.msra.mxu0 0.0
    %178 = vmatprep.subr.mxu0 0.0
    %179 = vmatpush1.msra.mxu0 0.0
    %180 = vmatprep.subr.mxu0 0.0
    %181 = vmatpush1.msra.mxu0 0.0
    %182 = vmatprep.subr.mxu0 0.0
    %183 = vmatpush1.msra.mxu0 0.0
    %184 = vmatprep.subr.mxu0 0.0
    %185 = vmatpush1.msra.mxu0 0.0
    %186 = vmatprep.subr.mxu0 0.0
    %187 = vmatpush1.msra.mxu0 0.0
    %188 = vmatprep.subr.mxu0 0.0
    %189 = vmatpush1.msra.mxu0 0.0
    %190 = vmatprep.subr.mxu0 0.0
    %191 = vmatpush1.msra.mxu0 0.0
    %192 = vmatprep.subr.mxu0 0.0
    %193 = vmatpush1.msra.mxu0 0.0
    %194 = vmatprep.subr.mxu0 0.0
    %195 = vmatpush1.msra.mxu0 0.0
    %196 = vmatprep.subr.mxu0 0.0
    %197 = vmatpush1.msra.mxu0 0.0
    %198 = vmatprep.subr.mxu0 0.0
    %199 = vmatpush1.msra.mxu0 0.0
    %200 = vmatprep.subr.mxu0 0.0
    %201 = vmatpush1.msra.mxu0 0.0
    %202 = vmatprep.subr.mxu0 0.0
    %203 = vmatpush1.msra.mxu0 0.0
    %204 = vmatprep.subr.mxu0 0.0
    %205 = vmatpush1.msra.mxu0 0.0
    %206 = vmatprep.subr.mxu0 0.0
    %207 = vmatpush1.msra.mxu0 0.0
    %208 = vmatprep.subr.mxu0 0.0
    %209 = vmatpush1.msra.mxu0 0.0
    %210 = vmatprep.subr.mxu0 0.0
    %211 = vmatpush1.msra.mxu0 0.0
    %212 = vmatprep.mubr.f32.mxu0 0.0
    %213 = vmatmul.mubr.f32.gmra.mrb[0].mxu0 %v146
    %v214 = vpop.f32.mrb[0].mxu0
    %v215 = vadd.f32 %v142, %v214
    %v216 = vpop.f32.mrb[0].mxu0
    %217 = vdwg.mxu0
    %v218 = vtanh.pop %v215
    %v219 = vld [vmem:[%s5] sm:$0xff]
    %v220 = vld [vmem:[%s5 + $0x8] sm:$0xff]
    %v221 = vld [vmem:[%s5 + $0x10] sm:$0xff]
    %v222 = vld [vmem:[%s5 + $0x18] sm:$0xff]
    %v223 = vld [vmem:[%s6] sm:$0x1]
    %v225 = vlaneseq
    %v226 = vshrl.u32 %v225, 7
    %v227 = vsub.s32 0, %v226
    %v228 = vrot.slane %v223, %v227
    %v231 = vsel %vm144, %v218, 0
    %233 = vmatprep.subr.mxu0 0.0
    %234 = vmatpush1.msra.mxu0 %v219
    %235 = vmatprep.subr.mxu0 0.0
    %236 = vmatpush1.msra.mxu0 %v220
    %237 = vmatprep.subr.mxu0 0.0
    %238 = vmatpush1.msra.mxu0 %v221
    %239 = vmatprep.subr.mxu0 0.0
    %240 = vmatpush1.msra.mxu0 %v222
    %241 = vmatprep.subr.mxu0 0.0
    %242 = vmatpush1.msra.mxu0 0.0
    %243 = vmatprep.subr.mxu0 0.0
    %244 = vmatpush1.msra.mxu0 0.0
    %245 = vmatprep.subr.mxu0 0.0
    %246 = vmatpush1.msra.mxu0 0.0
    %247 = vmatprep.subr.mxu0 0.0
    %248 = vmatpush1.msra.mxu0 0.0
    %249 = vmatprep.subr.mxu0 0.0
    %250 = vmatpush1.msra.mxu0 0.0
    %251 = vmatprep.subr.mxu0 0.0
    %252 = vmatpush1.msra.mxu0 0.0
    %253 = vmatprep.subr.mxu0 0.0
    %254 = vmatpush1.msra.mxu0 0.0
    %255 = vmatprep.subr.mxu0 0.0
    %256 = vmatpush1.msra.mxu0 0.0
    %257 = vmatprep.subr.mxu0 0.0
    %258 = vmatpush1.msra.mxu0 0.0
    %259 = vmatprep.subr.mxu0 0.0
    %260 = vmatpush1.msra.mxu0 0.0
    %261 = vmatprep.subr.mxu0 0.0
    %262 = vmatpush1.msra.mxu0 0.0
    %263 = vmatprep.subr.mxu0 0.0
    %264 = vmatpush1.msra.mxu0 0.0
    %265 = vmatprep.subr.mxu0 0.0
    %266 = vmatpush1.msra.mxu0 0.0
    %267 = vmatprep.subr.mxu0 0.0
    %268 = vmatpush1.msra.mxu0 0.0
    %269 = vmatprep.subr.mxu0 0.0
    %270 = vmatpush1.msra.mxu0 0.0
    %271 = vmatprep.subr.mxu0 0.0
    %272 = vmatpush1.msra.mxu0 0.0
    %273 = vmatprep.subr.mxu0 0.0
    %274 = vmatpush1.msra.mxu0 0.0
    %275 = vmatprep.subr.mxu0 0.0
    %276 = vmatpush1.msra.mxu0 0.0
    %277 = vmatprep.subr.mxu0 0.0
    %278 = vmatpush1.msra.mxu0 0.0
    %279 = vmatprep.subr.mxu0 0.0
    %280 = vmatpush1.msra.mxu0 0.0
    %281 = vmatprep.subr.mxu0 0.0
    %282 = vmatpush1.msra.mxu0 0.0
    %283 = vmatprep.subr.mxu0 0.0
    %284 = vmatpush1.msra.mxu0 0.0
    %285 = vmatprep.subr.mxu0 0.0
    %286 = vmatpush1.msra.mxu0 0.0
    %287 = vmatprep.subr.mxu0 0.0
    %288 = vmatpush1.msra.mxu0 0.0
    %289 = vmatprep.subr.mxu0 0.0
    %290 = vmatpush1.msra.mxu0 0.0
    %291 = vmatprep.subr.mxu0 0.0
    %292 = vmatpush1.msra.mxu0 0.0
    %293 = vmatprep.subr.mxu0 0.0
    %294 = vmatpush1.msra.mxu0 0.0
    %295 = vmatprep.subr.mxu0 0.0
    %296 = vmatpush1.msra.mxu0 0.0
    %297 = vmatprep.mubr.f32.mxu0 0.0
    %298 = vmatmul.mubr.f32.gmra.mrb[0].mxu0 %v231
    %v299 = vpop.f32.mrb[0].mxu0
    %v300 = vadd.f32 %v228, %v299
    %v301 = vpop.f32.mrb[0].mxu0
    %302 = vdwg.mxu0
    %v303 = vtanh.pop %v300
    %v304 = vmul.f32 %v303, %v303
    %305 = vadd.xlane.f32.xlu0 %v304
    %v306 = vpop.xlane.xlu0 %305
    %v307 = vadd.f32 %v306, 1e-12
    %v308 = vrsqrt.pop %v307
    %v309 = vmul.f32 %v306, %v308
    %v310 = vtanh.pop %v309
    %v311 = vmul.f32 %v310, %v308
    %v312 = vmul.f32 %v303, %v311
    %313 = vst [vmem:[#allocation2] sm:$0xff] %v312
    %v314 = vld [vmem:[%s7] sm:$0xff]
    %v315 = vld [vmem:[%s7 + $0x8] sm:$0xff]
    %v316 = vld [vmem:[%s7 + $0x10] sm:$0xff]
    %v317 = vld [vmem:[%s7 + $0x18] sm:$0xff]
    %v318 = vld [vmem:[%s7 + $0x20] sm:$0xff]
    %v319 = vld [vmem:[%s7 + $0x28] sm:$0xff]
    %v320 = vld [vmem:[%s7 + $0x30] sm:$0xff]
    %v321 = vld [vmem:[%s7 + $0x38] sm:$0xff]
    %v322 = vld [vmem:[%s7 + $0x40] sm:$0xff]
    %v323 = vld [vmem:[%s7 + $0x48] sm:$0xff]
    %v324 = vld [vmem:[%s7 + $0x50] sm:$0xff]
    %v325 = vld [vmem:[%s7 + $0x58] sm:$0xff]
    %v326 = vld [vmem:[%s7 + $0x60] sm:$0xff]
    %v327 = vld [vmem:[%s7 + $0x68] sm:$0xff]
    %v328 = vld [vmem:[%s7 + $0x70] sm:$0xff]
    %v329 = vld [vmem:[%s7 + $0x78] sm:$0xff]
    %v330 = vld [vmem:[%s8] sm:$0x1]
    %v332 = vlaneseq
    %v333 = vshrl.u32 %v332, 7
    %v334 = vsub.s32 0, %v333
    %v335 = vrot.slane %v330, %v334
    %337 = vmatprep.subr.mxu0 0.0
    %338 = vmatpush1.msra.mxu0 %v314
    %339 = vmatprep.subr.mxu0 0.0
    %340 = vmatpush1.msra.mxu0 %v315
    %341 = vmatprep.subr.mxu0 0.0
    %342 = vmatpush1.msra.mxu0 %v316
    %343 = vmatprep.subr.mxu0 0.0
    %344 = vmatpush1.msra.mxu0 %v317
    %345 = vmatprep.subr.mxu0 0.0
    %346 = vmatpush1.msra.mxu0 %v318
    %347 = vmatprep.subr.mxu0 0.0
    %348 = vmatpush1.msra.mxu0 %v319
    %349 = vmatprep.subr.mxu0 0.0
    %350 = vmatpush1.msra.mxu0 %v320
    %351 = vmatprep.subr.mxu0 0.0
    %352 = vmatpush1.msra.mxu0 %v321
    %353 = vmatprep.subr.mxu0 0.0
    %354 = vmatpush1.msra.mxu0 %v322
    %355 = vmatprep.subr.mxu0 0.0
    %356 = vmatpush1.msra.mxu0 %v323
    %357 = vmatprep.subr.mxu0 0.0
    %358 = vmatpush1.msra.mxu0 %v324
    %359 = vmatprep.subr.mxu0 0.0
    %360 = vmatpush1.msra.mxu0 %v325
    %361 = vmatprep.subr.mxu0 0.0
    %362 = vmatpush1.msra.mxu0 %v326
    %363 = vmatprep.subr.mxu0 0.0
    %364 = vmatpush1.msra.mxu0 %v327
    %365 = vmatprep.subr.mxu0 0.0
    %366 = vmatpush1.msra.mxu0 %v328
    %367 = vmatprep.subr.mxu0 0.0
    %368 = vmatpush1.msra.mxu0 %v329
    %369 = vmatprep.subr.mxu0 0.0
    %370 = vmatpush1.msra.mxu0 0.0
    %371 = vmatprep.subr.mxu0 0.0
    %372 = vmatpush1.msra.mxu0 0.0
    %373 = vmatprep.subr.mxu0 0.0
    %374 = vmatpush1.msra.mxu0 0.0
    %375 = vmatprep.subr.mxu0 0.0
    %376 = vmatpush1.msra.mxu0 0.0
    %377 = vmatprep.subr.mxu0 0.0
    %378 = vmatpush1.msra.mxu0 0.0
    %379 = vmatprep.subr.mxu0 0.0
    %380 = vmatpush1.msra.mxu0 0.0
    %381 = vmatprep.subr.mxu0 0.0
    %382 = vmatpush1.msra.mxu0 0.0
    %383 = vmatprep.subr.mxu0 0.0
    %384 = vmatpush1.msra.mxu0 0.0
    %385 = vmatprep.subr.mxu0 0.0
    %386 = vmatpush1.msra.mxu0 0.0
    %387 = vmatprep.subr.mxu0 0.0
    %388 = vmatpush1.msra.mxu0 0.0
    %389 = vmatprep.subr.mxu0 0.0
    %390 = vmatpush1.msra.mxu0 0.0
    %391 = vmatprep.subr.mxu0 0.0
    %392 = vmatpush1.msra.mxu0 0.0
    %393 = vmatprep.subr.mxu0 0.0
    %394 = vmatpush1.msra.mxu0 0.0
    %395 = vmatprep.subr.mxu0 0.0
    %396 = vmatpush1.msra.mxu0 0.0
    %397 = vmatprep.subr.mxu0 0.0
    %398 = vmatpush1.msra.mxu0 0.0
    %399 = vmatprep.subr.mxu0 0.0
    %400 = vmatpush1.msra.mxu0 0.0
    %401 = vmatprep.mubr.f32.mxu0 0.0
    %402 = vmatmul.mubr.f32.gmra.mrb[0].mxu0 %v312
    %v403 = vpop.f32.mrb[0].mxu0
    %v404 = vadd.f32 %v335, %v403
    %v405 = vpop.f32.mrb[0].mxu0
    %406 = vdwg.mxu0
    %v407 = vtanh.pop %v404
    %v408 = vld [vmem:[%s9] sm:$0xff]
    %v409 = vld [vmem:[%s9 + $0x8] sm:$0xff]
    %v410 = vld [vmem:[%s9 + $0x10] sm:$0xff]
    %v411 = vld [vmem:[%s9 + $0x18] sm:$0xff]
    %v412 = vld [vmem:[%s10] sm:$0x1]
    %v414 = vlaneseq
    %v415 = vshrl.u32 %v414, 7
    %v416 = vsub.s32 0, %v415
    %v417 = vrot.slane %v412, %v416
    %v420 = vsel %vm144, %v407, 0
    %422 = vmatprep.subr.mxu0 0.0
    %423 = vmatpush1.msra.mxu0 %v408
    %424 = vmatprep.subr.mxu0 0.0
    %425 = vmatpush1.msra.mxu0 %v409
    %426 = vmatprep.subr.mxu0 0.0
    %427 = vmatpush1.msra.mxu0 %v410
    %428 = vmatprep.subr.mxu0 0.0
    %429 = vmatpush1.msra.mxu0 %v411
    %430 = vmatprep.subr.mxu0 0.0
    %431 = vmatpush1.msra.mxu0 0.0
    %432 = vmatprep.subr.mxu0 0.0
    %433 = vmatpush1.msra.mxu0 0.0
    %434 = vmatprep.subr.mxu0 0.0
    %435 = vmatpush1.msra.mxu0 0.0
    %436 = vmatprep.subr.mxu0 0.0
    %437 = vmatpush1.msra.mxu0 0.0
    %438 = vmatprep.subr.mxu0 0.0
    %439 = vmatpush1.msra.mxu0 0.0
    %440 = vmatprep.subr.mxu0 0.0
    %441 = vmatpush1.msra.mxu0 0.0
    %442 = vmatprep.subr.mxu0 0.0
    %443 = vmatpush1.msra.mxu0 0.0
    %444 = vmatprep.subr.mxu0 0.0
    %445 = vmatpush1.msra.mxu0 0.0
    %446 = vmatprep.subr.mxu0 0.0
    %447 = vmatpush1.msra.mxu0 0.0
    %448 = vmatprep.subr.mxu0 0.0
    %449 = vmatpush1.msra.mxu0 0.0
    %450 = vmatprep.subr.mxu0 0.0
    %451 = vmatpush1.msra.mxu0 0.0
    %452 = vmatprep.subr.mxu0 0.0
    %453 = vmatpush1.msra.mxu0 0.0
    %454 = vmatprep.subr.mxu0 0.0
    %455 = vmatpush1.msra.mxu0 0.0
    %456 = vmatprep.subr.mxu0 0.0
    %457 = vmatpush1.msra.mxu0 0.0
    %458 = vmatprep.subr.mxu0 0.0
    %459 = vmatpush1.msra.mxu0 0.0
    %460 = vmatprep.subr.mxu0 0.0
    %461 = vmatpush1.msra.mxu0 0.0
    %462 = vmatprep.subr.mxu0 0.0
    %463 = vmatpush1.msra.mxu0 0.0
    %464 = vmatprep.subr.mxu0 0.0
    %465 = vmatpush1.msra.mxu0 0.0
    %466 = vmatprep.subr.mxu0 0.0
    %467 = vmatpush1.msra.mxu0 0.0
    %468 = vmatprep.subr.mxu0 0.0
    %469 = vmatpush1.msra.mxu0 0.0
    %470 = vmatprep.subr.mxu0 0.0
    %471 = vmatpush1.msra.mxu0 0.0
    %472 = vmatprep.subr.mxu0 0.0
    %473 = vmatpush1.msra.mxu0 0.0
    %474 = vmatprep.subr.mxu0 0.0
    %475 = vmatpush1.msra.mxu0 0.0
    %476 = vmatprep.subr.mxu0 0.0
    %477 = vmatpush1.msra.mxu0 0.0
    %478 = vmatprep.subr.mxu0 0.0
    %479 = vmatpush1.msra.mxu0 0.0
    %480 = vmatprep.subr.mxu0 0.0
    %481 = vmatpush1.msra.mxu0 0.0
    %482 = vmatprep.subr.mxu0 0.0
    %483 = vmatpush1.msra.mxu0 0.0
    %484 = vmatprep.subr.mxu0 0.0
    %485 = vmatpush1.msra.mxu0 0.0
    %486 = vmatprep.mubr.f32.mxu0 0.0
    %487 = vmatmul.mubr.f32.gmra.mrb[0].mxu0 %v420
    %v488 = vpop.f32.mrb[0].mxu0
    %v489 = vadd.f32 %v417, %v488
    %v490 = vpop.f32.mrb[0].mxu0
    %491 = vdwg.mxu0
    %v492 = vtanh.pop %v489
    %v493 = vld [vmem:[%s11] sm:$0xff]
    %v494 = vld [vmem:[%s11 + $0x8] sm:$0xff]
    %v495 = vld [vmem:[%s11 + $0x10] sm:$0xff]
    %v496 = vld [vmem:[%s11 + $0x18] sm:$0xff]
    %v497 = vld [vmem:[%s12] sm:$0x1]
    %v499 = vlaneseq
    %v500 = vshrl.u32 %v499, 7
    %v501 = vsub.s32 0, %v500
    %v502 = vrot.slane %v497, %v501
    %v505 = vsel %vm144, %v492, 0
    %507 = vmatprep.subr.mxu0 0.0
    %508 = vmatpush1.msra.mxu0 %v493
    %509 = vmatprep.subr.mxu0 0.0
    %510 = vmatpush1.msra.mxu0 %v494
    %511 = vmatprep.subr.mxu0 0.0
    %512 = vmatpush1.msra.mxu0 %v495
    %513 = vmatprep.subr.mxu0 0.0
    %514 = vmatpush1.msra.mxu0 %v496
    %515 = vmatprep.subr.mxu0 0.0
    %516 = vmatpush1.msra.mxu0 0.0
    %517 = vmatprep.subr.mxu0 0.0
    %518 = vmatpush1.msra.mxu0 0.0
    %519 = vmatprep.subr.mxu0 0.0
    %520 = vmatpush1.msra.mxu0 0.0
    %521 = vmatprep.subr.mxu0 0.0
    %522 = vmatpush1.msra.mxu0 0.0
    %523 = vmatprep.subr.mxu0 0.0
    %524 = vmatpush1.msra.mxu0 0.0
    %525 = vmatprep.subr.mxu0 0.0
    %526 = vmatpush1.msra.mxu0 0.0
    %527 = vmatprep.subr.mxu0 0.0
    %528 = vmatpush1.msra.mxu0 0.0
    %529 = vmatprep.subr.mxu0 0.0
    %530 = vmatpush1.msra.mxu0 0.0
    %531 = vmatprep.subr.mxu0 0.0
    %532 = vmatpush1.msra.mxu0 0.0
    %533 = vmatprep.subr.mxu0 0.0
    %534 = vmatpush1.msra.mxu0 0.0
    %535 = vmatprep.subr.mxu0 0.0
    %536 = vmatpush1.msra.mxu0 0.0
    %537 = vmatprep.subr.mxu0 0.0
    %538 = vmatpush1.msra.mxu0 0.0
    %539 = vmatprep.subr.mxu0 0.0
    %540 = vmatpush1.msra.mxu0 0.0
    %541 = vmatprep.subr.mxu0 0.0
    %542 = vmatpush1.msra.mxu0 0.0
    %543 = vmatprep.subr.mxu0 0.0
    %544 = vmatpush1.msra.mxu0 0.0
    %545 = vmatprep.subr.mxu0 0.0
    %546 = vmatpush1.msra.mxu0 0.0
    %547 = vmatprep.subr.mxu0 0.0
    %548 = vmatpush1.msra.mxu0 0.0
    %549 = vmatprep.subr.mxu0 0.0
    %550 = vmatpush1.msra.mxu0 0.0
    %551 = vmatprep.subr.mxu0 0.0
    %552 = vmatpush1.msra.mxu0 0.0
    %553 = vmatprep.subr.mxu0 0.0
    %554 = vmatpush1.msra.mxu0 0.0
    %555 = vmatprep.subr.mxu0 0.0
    %556 = vmatpush1.msra.mxu0 0.0
    %557 = vmatprep.subr.mxu0 0.0
    %558 = vmatpush1.msra.mxu0 0.0
    %559 = vmatprep.subr.mxu0 0.0
    %560 = vmatpush1.msra.mxu0 0.0
    %561 = vmatprep.subr.mxu0 0.0
    %562 = vmatpush1.msra.mxu0 0.0
    %563 = vmatprep.subr.mxu0 0.0
    %564 = vmatpush1.msra.mxu0 0.0
    %565 = vmatprep.subr.mxu0 0.0
    %566 = vmatpush1.msra.mxu0 0.0
    %567 = vmatprep.subr.mxu0 0.0
    %568 = vmatpush1.msra.mxu0 0.0
    %569 = vmatprep.subr.mxu0 0.0
    %570 = vmatpush1.msra.mxu0 0.0
    %571 = vmatprep.mubr.f32.mxu0 0.0
    %572 = vmatmul.mubr.f32.gmra.mrb[0].mxu0 %v505
    %v573 = vpop.f32.mrb[0].mxu0
    %v574 = vadd.f32 %v502, %v573
    %v575 = vpop.f32.mrb[0].mxu0
    %576 = vdwg.mxu0
    %v577 = vtanh.pop %v574
    %578 = vst [vmem:[#allocation4] sm:$0xff] %v577
    // Predicated region
    $region54: #{sdne_forward.1} parent=1 // pred_check
      _
    $region55: #{sdne_forward.1} parent=1 // pred_check_branch
      %580 = sbr.rel (0) target = $region57
    $region56: #{sdne_forward.1} parent=1 // pred_region
      %s582 = ssub.s32 128, 128
      %583 = vsyncadd [#allocation3], %s582
      %s585 = sshll.u32 [#allocation2], 4
      %s586 = int_to_ptr.vmem [resolvable:$true] %s585
      %588 = dma.vmem_to_hbm [thread:$0]  %s586, 128, %s13, [#allocation3]
    $region57: #{sdne_forward.1} parent=1 // pred_fallthru
      _
    // Predicated region
    $region58: #{sdne_forward.1} parent=1 // pred_check
      _
    $region59: #{sdne_forward.1} parent=1 // pred_check_branch
      %590 = sbr.rel (0) target = $region61
    $region60: #{sdne_forward.1} parent=1 // pred_region
      %s592 = ssub.s32 128, 128
      %593 = vsyncadd [#allocation5], %s592
      %s595 = sshll.u32 [#allocation4], 4
      %s596 = int_to_ptr.vmem [resolvable:$true] %s595
      %598 = dma.vmem_to_hbm [thread:$0]  %s596, 128, %s14, [#allocation5]
    $region61: #{sdne_forward.1} parent=1 // pred_fallthru
      _
    // Predicated region
    $region62: #{sdne_forward.1} parent=1 // pred_check
      _
    $region63: #{sdne_forward.1} parent=1 // pred_check_branch
      %600 = sbr.rel (0) target = $region65
    $region64: #{sdne_forward.1} parent=1 // pred_region
      %601 = dma.done [#allocation3], 128
    $region65: #{sdne_forward.1} parent=1 // pred_fallthru
      _
    // Predicated region
    $region66: #{sdne_forward.1} parent=1 // pred_check
      _
    $region67: #{sdne_forward.1} parent=1 // pred_check_branch
      %603 = sbr.rel (0) target = $region69
    $region68: #{sdne_forward.1} parent=1 // pred_region
      %604 = dma.done [#allocation5], 128
    $region69: #{sdne_forward.1} parent=1 // pred_fallthru
      _
    %605 = vsyncpa [#allocation3], 1
    %606 = vsyncpa [#allocation5], 1

</llo_original>
